<compile_context>
chip_gen: v5e
topology: v5e:2x2
jax: 0.10.0
libtpu: 0.0.40
codegen_flags: <defaults>
</compile_context>

<pallas_src>
import jax
import jax.numpy as jnp
from jax.experimental import pallas as pl
from jax.experimental.pallas import tpu as pltpu

LAYER_NUM = 8


def _affine_kernel(w_ref, b_ref, x_ref, o_ref):
    # w_ref: (K, K) block-diag W_eff (io_dtype); b_ref: (1, K) f32;
    # x_ref / o_ref: (tile_r, K) io_dtype.  Single MXU push, f32 accumulate.
    acc = jnp.dot(x_ref[...], w_ref[...], preferred_element_type=jnp.float32)
    o_ref[...] = (acc + b_ref[...]).astype(o_ref.dtype)


def _const_block_spec(shape):
    # Weights / bias never change across grid steps: constant index_map and,
    # when supported, a single pipeline buffer (frees VMEM headroom).
    idx = lambda i: (0, 0)
    try:
        return pl.BlockSpec(shape, idx, pipeline_mode=pl.Buffered(1))
    except (AttributeError, TypeError):
        return pl.BlockSpec(shape, idx)


def _choose_tile_r(R, cap_rows):
    """Largest multiple of 8 that divides R and is <= cap_rows (fallback: R)."""
    cap = min(cap_rows, R)
    cap -= cap % 8
    t = cap
    while t >= 8:
        if R % t == 0:
            return t
        t -= 8
    return R  # single full block (block dim == array dim is always legal)


def mapping_net(x, weights, biases, *, lane_width=128, tile_r=None, io_dtype=None):
    """x: (B, D); weights: (L, D, D) stored (in, out) so layer i computes
    h @ weights[i] + biases[i]; biases: (L, 1, D).  Returns (B, D) in io_dtype.
    Requires inchannel == outchannel (as in the original module's Sequential)."""
    B, D = x.shape
    L = weights.shape[0]
    assert weights.shape[1] == weights.shape[2] == D, "inchannel must equal outchannel"
    assert biases.shape == (L, 1, D)

    # ---- Fold the activation-free L-layer chain into one affine map (f32). ----
    w_eff = jnp.eye(D, dtype=jnp.float32)
    b_eff = jnp.zeros((1, D), dtype=jnp.float32)
    for i in range(L):
        wi = weights[i].astype(jnp.float32)
        w_eff = w_eff @ wi
        b_eff = b_eff @ wi + biases[i].astype(jnp.float32)

    io_dtype = jnp.dtype(x.dtype) if io_dtype is None else jnp.dtype(io_dtype)

    # ---- Lane-dense layout with NO transposes: (B, D) -> (R, K) free reshape. --
    K = lane_width                       # 128 default; 256 also fine on v6e/v7x
    assert K % 128 == 0, "lane_width must be a multiple of 128"
    assert K % D == 0, f"lane_width={K} must be a multiple of D={D}"
    assert (B * D) % K == 0, f"B*D={B * D} must be a multiple of lane_width={K}"
    n_copies = K // D
    R = (B * D) // K

    w_bd = jnp.kron(jnp.eye(n_copies, dtype=jnp.float32), w_eff).astype(io_dtype)
    b_bd = jnp.tile(b_eff, (1, n_copies))            # (1, K), bias add stays f32
    x_rk = x.reshape(R, K).astype(io_dtype)          # free: row-major contiguous

    # ---- Tile sizing: ~4 MiB activation blocks, >= 2 grid steps when possible. -
    itemsize = jnp.dtype(io_dtype).itemsize
    if tile_r is None:
        cap_rows = max(8, (4 << 20) // (K * itemsize))     # ~4 MiB per block
        if R >= 16:
            cap_rows = min(cap_rows, max(8, R // 2))       # keep both v7x TCs busy
        tile_r = _choose_tile_r(R, cap_rows)
    assert R % tile_r == 0, f"tile_r={tile_r} must divide R={R}"
    assert tile_r % 8 == 0 or tile_r == R, "tile_r must be a multiple of 8 (or == R)"

    block_bytes = tile_r * K * itemsize
    # in + out blocks, double-buffered, plus weights/bias and headroom.
    vmem_limit = int(min(56 << 20, max(32 << 20, 4 * block_bytes + (4 << 20))))
    grid = (R // tile_r,)

    out_rk = pl.pallas_call(
        _affine_kernel,
        out_shape=jax.ShapeDtypeStruct((R, K), io_dtype),
        grid_spec=pltpu.PrefetchScalarGridSpec(
            num_scalar_prefetch=0,
            grid=grid,
            in_specs=[
                _const_block_spec((K, K)),                      # block-diag W_eff (resident)
                _const_block_spec((1, K)),                      # tiled bias (resident, f32)
                pl.BlockSpec((tile_r, K), lambda i: (i, 0)),    # activation tile
            ],
            out_specs=pl.BlockSpec((tile_r, K), lambda i: (i, 0)),
        ),
        compiler_params=pltpu.CompilerParams(
            dimension_semantics=("parallel",),
            vmem_limit_bytes=vmem_limit,
        ),
    )(w_bd, b_bd, x_rk)

    return out_rk.reshape(B, D)   # free reshape back; cast outside if f32 needed


def init_params(key, inchannel, outchannel, layer_num=LAYER_NUM):
    """Deterministic init mimicking nn.Linear default: U(-1/sqrt(in), 1/sqrt(in))."""
    ws, bs = [], []
    bound = 1.0 / (inchannel ** 0.5)
    for _ in range(layer_num):
        kw, kb, key = jax.random.split(key, 3)
        # PyTorch weight is (out, in); we store the transpose (in, out) for h @ W.
        w = jax.random.uniform(kw, (inchannel, outchannel), jnp.float32,
                               minval=-bound, maxval=bound)
        b = jax.random.uniform(kb, (1, outchannel), jnp.float32,
                               minval=-bound, maxval=bound)
        ws.append(w)
        bs.append(b)
    return jnp.stack(ws, axis=0), jnp.stack(bs, axis=0)


def mapping_net_ref(x, weights, biases):
    h = x
    for i in range(weights.shape[0]):
        h = h @ weights[i] + biases[i]
    return h


if __name__ == "__main__":
    key = jax.random.PRNGKey(0)
    # inchannel == outchannel == 32 (required for the Sequential to chain).
    B, D = 256, 32

    kx, kp = jax.random.split(key)
    x = jax.random.normal(kx, (B, D), jnp.float32)
    W, bvec = init_params(kp, D, D)

    # f32 path: (B,D)->(64,128) reshape, grid of 2 parallel lane-dense blocks.
    out = mapping_net(x, W, bvec)
    out = jax.block_until_ready(out)

    ref = mapping_net_ref(x, W, bvec)
    assert out.shape == (B, D)
    assert jnp.allclose(out, ref, atol=1e-4, rtol=1e-4), "f32 mismatch vs reference"

    # bf16 I/O path (halves HBM traffic on this mem-bound kernel); validated
    # against the f32 per-layer reference with a looser tolerance.
    out_bf16 = jax.block_until_ready(mapping_net(x, W, bvec, io_dtype=jnp.bfloat16))
    assert jnp.allclose(out_bf16.astype(jnp.float32), ref, atol=5e-2, rtol=5e-2), \
        "bf16 mismatch vs reference"

    print("KERNEL_OK")
</pallas_src>

<mosaic_0001>
module attributes {stable_mosaic.version = 11 : i64} {
  func.func @_affine_kernel(%arg0: i32, %arg1: memref<128x128xf32, #tpu.memory_space<vmem>>, %arg2: memref<1x128xf32, #tpu.memory_space<vmem>>, %arg3: memref<32x128xf32, #tpu.memory_space<vmem>>, %arg4: memref<32x128xf32, #tpu.memory_space<vmem>>) attributes {dimension_semantics = [#tpu.dimension_semantics<parallel>], iteration_bounds = array<i64: 2>, scalar_prefetch = 0 : i64, scratch_operands = 0 : i64, tpu.core_type = #tpu.core_type<tc>, window_params = [{pipeline_mode = #tpu.pipeline_mode<synchronous>, transform_indices = @transform_0, window_bounds = array<i64: 128, 128>}, {pipeline_mode = #tpu.pipeline_mode<synchronous>, transform_indices = @transform_1, window_bounds = array<i64: 1, 128>}, {transform_indices = @transform_2, window_bounds = array<i64: 32, 128>}, {transform_indices = @transform_3, window_bounds = array<i64: 32, 128>}]} {
    %c0 = arith.constant 0 : index
    %c0_0 = arith.constant 0 : index
    %0 = vector.load %arg3[%c0, %c0_0] : memref<32x128xf32, #tpu.memory_space<vmem>>, vector<32x128xf32>
    %c0_1 = arith.constant 0 : index
    %c0_2 = arith.constant 0 : index
    %1 = vector.load %arg1[%c0_1, %c0_2] : memref<128x128xf32, #tpu.memory_space<vmem>>, vector<128x128xf32>
    %cst = arith.constant dense<0.000000e+00> : vector<32x128xf32>
    %2 = tpu.matmul %0, %1, %cst {dimension_numbers = #tpu.dot_dimension_numbers<[1], [0], [0], [1], [0, 0, 1, 1], [], []>} : vector<32x128xf32>, vector<128x128xf32>, vector<32x128xf32> -> vector<32x128xf32>
    %c0_3 = arith.constant 0 : index
    %c0_4 = arith.constant 0 : index
    %3 = vector.load %arg2[%c0_3, %c0_4] : memref<1x128xf32, #tpu.memory_space<vmem>>, vector<1x128xf32>
    %4 = vector.broadcast %3 : vector<1x128xf32> to vector<32x128xf32>
    %5 = arith.addf %2, %4 : vector<32x128xf32>
    %c0_5 = arith.constant 0 : index
    %c0_6 = arith.constant 0 : index
    %6 = vector.load %arg4[%c0_5, %c0_6] : memref<32x128xf32, #tpu.memory_space<vmem>>, vector<32x128xf32>
    tpu.vector_store %arg4[%c0_5, %c0_6], %5 {strides = array<i32>} : memref<32x128xf32, #tpu.memory_space<vmem>>, vector<32x128xf32>,
    return
  }
  func.func @transform_0(%arg0: i32) -> (i32, i32) {
    %c0_i32 = arith.constant 0 : i32
    %c0_i32_0 = arith.constant 0 : i32
    %c0_i32_1 = arith.constant 0 : i32
    return %c0_i32, %c0_i32_0 : i32, i32
  }
  func.func @transform_1(%arg0: i32) -> (i32, i32) {
    %c0_i32 = arith.constant 0 : i32
    %c0_i32_0 = arith.constant 0 : i32
    %c0_i32_1 = arith.constant 0 : i32
    return %c0_i32, %c0_i32_0 : i32, i32
  }
  func.func @transform_2(%arg0: i32) -> (i32, i32) {
    %c0_i32 = arith.constant 0 : i32
    %c0_i32_0 = arith.constant 0 : i32
    return %arg0, %c0_i32 : i32, i32
  }
  func.func @transform_3(%arg0: i32) -> (i32, i32) {
    %c0_i32 = arith.constant 0 : i32
    %c0_i32_0 = arith.constant 0 : i32
    return %arg0, %c0_i32 : i32, i32
  }
}

</mosaic_0001>

<llo_original>
// kernel: tpu_custom_call.1
$region0: #{tpu_custom_call.1}
  #allocation0 [shape = 'u32[]', space=smem, size = 0x4, offset = 0x4, fixed_abs, tag = 'smem constant byte address 0x4 - core index']
  #allocation1 [shape = 'u32[72,128]{1,0:T(1,128)}', space=vmem, size = 0x9000, scoped, tag = 'internal scratch']
  %s0 = inlined_call_operand.hbm [shape: f32[128,128], index: 0, kind: input, shape index: {}]
  %s1 = inlined_call_operand.hbm [shape: f32[1,128], index: 1, kind: input, shape index: {}]
  %s2 = inlined_call_operand.hbm [shape: f32[64,128], index: 2, kind: input, shape index: {}]
  %s3 = inlined_call_operand.hbm [shape: f32[64,128], index: 3, kind: output, shape index: {}]
  %s4 = sld [smem:[#allocation0]]
  $region57: #{tpu_custom_call.1} parent=0
    _
  %s6 = ssub.s32 1, %s4
  %s7 = scalar_select 0, %s6, %s4
  $region1: #{tpu_custom_call.1} parent=0
    #allocation2 [shape = 'u8[65536]{0}', space=vmem, size = 0x10000, scoped, tag = 'input window, operand 0, single buffered']
    #allocation3 [shape = 's32[2]{0}', space=sflag, size = 0x8, scoped, tag = 'scoped memory for tpu_custom_call.1']
    #allocation4 [shape = 's32[2]{0}', space=sflag, size = 0x8, scoped, tag = 'scoped memory for tpu_custom_call.1']
    #allocation5 [shape = 'u8[512]{0}', space=vmem, size = 0x400, scoped, tag = 'input window, operand 1, single buffered']
    #allocation6 [shape = 's32[1]{0}', space=sflag, size = 0x4, scoped, tag = 'scoped memory for tpu_custom_call.1']
    #allocation7 [shape = 'u8[32768]{0}', space=vmem, size = 0x8000, scoped, tag = 'input window, operand 2']
    #allocation8 [shape = 'u8[32768]{0}', space=vmem, size = 0x8000, scoped, tag = 'output window, operand 0']
    %8 = vsyncpa [#allocation3], 0
    %9 = vsyncpa [#allocation6], 0
    %10 = vsyncpa [#allocation4], 0
    %s11 = scalar_lea.sflag [#allocation4], 1
    %12 = vsyncpa %s11, 0
    loop: start=0, step=1, limit=4
    $region2: #{tpu_custom_call.1} parent=1 // loop_pre_header
      _
    $region3: #{tpu_custom_call.1} parent=1 // loop_header
      %s14 = sphi 0, %s18
      %p15 = scmp.ge.s32.totalorder %s14, 4
      %s22 = sphi 0, %s22
      %s24 = sphi 0, %s22
      %s25 = sphi 0, %s24
      %s39 = sphi 0, %s25
      %s43 = sphi 0, %s43
      %s45 = sphi 0, %s43
      %s46 = sphi 0, %s45
      %s60 = sphi 0, %s46
      %s66 = sphi 0, %s68
      %s69 = sphi 0, %s66
      %s70 = sphi 0, %s69
      %s86 = sphi 0, %s70
      %s92 = sphi 0, %s94
      %s95 = sphi 0, %s92
      %s96 = sphi 0, %s95
      %s112 = sphi 0, %s96
    $region4: #{tpu_custom_call.1} parent=1 // loop_header_branch
      %17 = sbr.rel (%p15) target = $region8
    $region5: #{tpu_custom_call.1} parent=1 // loop_body
      %s19 = ssub.s32 %s14, 1
      %s20 = ssub.s32 %s14, 2
      %s21 = sadd.s32 %s14, 1
      %s23 = sadd.s32 %s22, 1
      %p26 = scmp.eq.s32.totalorder %s14, 1
      %p27 = scmp.ne.s32.totalorder %s22, %s24
      %p28 = scmp.eq.s32.totalorder %s14, 0
      %p29 = por %p27, %p28
      %p30 = scmp.ne.s32.totalorder %s22, %s24
      %p31 = scmp.eq.s32.totalorder %s19, 1
      %p32 = por %p30, %p31
      %p33 = scmp.ne.s32.totalorder %s24, %s25
      %p34 = scmp.eq.s32.totalorder %s19, 0
      %p35 = por %p33, %p34
      %p36 = scmp.ne.s32.totalorder %s24, %s25
      %p37 = scmp.eq.s32.totalorder %s20, 1
      %p38 = por %p36, %p37
      %p40 = scmp.ne.s32.totalorder %s25, %s39
      %p41 = scmp.eq.s32.totalorder %s20, 0
      %p42 = por %p40, %p41
      %s44 = sadd.s32 %s43, 1
      %p47 = scmp.eq.s32.totalorder %s14, 1
      %p48 = scmp.ne.s32.totalorder %s43, %s45
      %p49 = scmp.eq.s32.totalorder %s14, 0
      %p50 = por %p48, %p49
      %p51 = scmp.ne.s32.totalorder %s43, %s45
      %p52 = scmp.eq.s32.totalorder %s19, 1
      %p53 = por %p51, %p52
      %p54 = scmp.ne.s32.totalorder %s45, %s46
      %p55 = scmp.eq.s32.totalorder %s19, 0
      %p56 = por %p54, %p55
      %p57 = scmp.ne.s32.totalorder %s45, %s46
      %p58 = scmp.eq.s32.totalorder %s20, 1
      %p59 = por %p57, %p58
      %p61 = scmp.ne.s32.totalorder %s46, %s60
      %p62 = scmp.eq.s32.totalorder %s20, 0
      %p63 = por %p61, %p62
      %s64 = ssub.s32 %s14, %s21
      %p65 = scmp.eq.s32.totalorder %s64, 0
      %s67 = sadd.s32 %s66, 1
      %s68 = scalar_select %p65, %s66, %s67
      %p71 = pneg %p65
      %p72 = scmp.eq.s32.totalorder %s14, 1
      %p73 = por %p71, %p72
      %p74 = scmp.ne.s32.totalorder %s66, %s69
      %p75 = scmp.eq.s32.totalorder %s14, 0
      %p76 = por %p74, %p75
      %p77 = scmp.ne.s32.totalorder %s66, %s69
      %p78 = scmp.eq.s32.totalorder %s19, 1
      %p79 = por %p77, %p78
      %p80 = scmp.ne.s32.totalorder %s69, %s70
      %p81 = scmp.eq.s32.totalorder %s19, 0
      %p82 = por %p80, %p81
      %p83 = scmp.ne.s32.totalorder %s69, %s70
      %p84 = scmp.eq.s32.totalorder %s20, 1
      %p85 = por %p83, %p84
      %p87 = scmp.ne.s32.totalorder %s70, %s86
      %p88 = scmp.eq.s32.totalorder %s20, 0
      %p89 = por %p87, %p88
      %s90 = ssub.s32 %s14, %s21
      %p91 = scmp.eq.s32.totalorder %s90, 0
      %s93 = sadd.s32 %s92, 1
      %s94 = scalar_select %p91, %s92, %s93
      %p97 = pneg %p91
      %p98 = scmp.eq.s32.totalorder %s14, 1
      %p99 = por %p97, %p98
      %p100 = scmp.ne.s32.totalorder %s92, %s95
      %p101 = scmp.eq.s32.totalorder %s14, 0
      %p102 = por %p100, %p101
      %p103 = scmp.ne.s32.totalorder %s92, %s95
      %p104 = scmp.eq.s32.totalorder %s19, 1
      %p105 = por %p103, %p104
      %p106 = scmp.ne.s32.totalorder %s95, %s96
      %p107 = scmp.eq.s32.totalorder %s19, 0
      %p108 = por %p106, %p107
      %p109 = scmp.ne.s32.totalorder %s95, %s96
      %p110 = scmp.eq.s32.totalorder %s20, 1
      %p111 = por %p109, %p110
      %p113 = scmp.ne.s32.totalorder %s96, %s112
      %p114 = scmp.eq.s32.totalorder %s20, 0
      %p115 = por %p113, %p114
      %p116 = scmp.le.s32.totalorder 1, %s14
      %p117 = scmp.lt.s32.totalorder %s14, 3
      %p118 = pnand %p116, %p117
      %p119 = pneg %p118
      // Predicated region
      $region9: #{tpu_custom_call.1} parent=5 // pred_check
        _
      $region10: #{tpu_custom_call.1} parent=5 // pred_check_branch
        %121 = sbr.rel (%p118) target = $region12
      $region11: #{tpu_custom_call.1} parent=5 // pred_region
        %s122 = ssub.s32 %s14, 1
        // Predicated region
        $region13: #{tpu_custom_call.1} parent=11 // pred_check
          %p123 = pneg %p35
        $region14: #{tpu_custom_call.1} parent=11 // pred_check_branch
          %125 = sbr.rel (%p123) target = $region16
        $region15: #{tpu_custom_call.1} parent=11 // pred_region
          %127 = vsyncadd [#allocation3], 0
          %s128 = sshll.u32 %s0, 4
          %s129 = int_to_ptr.hbm [resolvable:$true] %s128
          %s130 = sshll.u32 [#allocation2], 4
          %s131 = int_to_ptr.vmem [resolvable:$true] %s130
          %136 = dma.hbm_to_vmem [thread:$0]  %s129, 2048, %s131, [#allocation3], 128, 128, 8
        $region16: #{tpu_custom_call.1} parent=11 // pred_fallthru
          _
        // Predicated region
        $region17: #{tpu_custom_call.1} parent=11 // pred_check
          %p137 = pneg %p56
        $region18: #{tpu_custom_call.1} parent=11 // pred_check_branch
          %139 = sbr.rel (%p137) target = $region20
        $region19: #{tpu_custom_call.1} parent=11 // pred_region
          %141 = vsyncadd [#allocation6], 0
          %s143 = sshll.u32 %s1, 4
          %s144 = int_to_ptr.hbm [resolvable:$true] %s143
          %s145 = sshll.u32 [#allocation5], 4
          %s146 = int_to_ptr.vmem [resolvable:$true] %s145
          %148 = dma.hbm_to_vmem [thread:$0]  %s144, 16, %s146, [#allocation6]
        $region20: #{tpu_custom_call.1} parent=11 // pred_fallthru
          _
      $region12: #{tpu_custom_call.1} parent=5 // pred_fallthru
        _
      %p149 = scmp.lt.s32.totalorder %s14, 2
      // Predicated region
      $region21: #{tpu_custom_call.1} parent=5 // pred_check
        %p150 = pneg %p149
      $region22: #{tpu_custom_call.1} parent=5 // pred_check_branch
        %152 = sbr.rel (%p150) target = $region24
      $region23: #{tpu_custom_call.1} parent=5 // pred_region
        // Predicated region
        $region25: #{tpu_custom_call.1} parent=23 // pred_check
          %p153 = pneg %p76
        $region26: #{tpu_custom_call.1} parent=23 // pred_check_branch
          %155 = sbr.rel (%p153) target = $region28
        $region27: #{tpu_custom_call.1} parent=23 // pred_region
          %s156 = sand.u32 %s14, 1
          %s157 = scalar_lea.sflag [#allocation3], %s156
          %s158 = sand.u32 %s66, 1
          %s159 = smul.addr %s158, 32
          %s160 = scalar_lea.vmem [#allocation7], %s159
          %s161 = smul.u32 4, %s14
          %163 = vsyncadd %s157, 0
          %s164 = smul.addr %s161, 8
          %s165 = scalar_lea.hbm %s2, %s164
          %s166 = sshll.u32 %s165, 4
          %s167 = int_to_ptr.hbm [resolvable:$true] %s166
          %s168 = sshll.u32 %s160, 4
          %s169 = int_to_ptr.vmem [resolvable:$true] %s168
          %174 = dma.hbm_to_vmem [thread:$0]  %s167, 512, %s169, %s157, 128, 128, 8
        $region28: #{tpu_custom_call.1} parent=23 // pred_fallthru
          _
      $region24: #{tpu_custom_call.1} parent=5 // pred_fallthru
        _
      %p175 = scmp.le.s32.totalorder 1, %s14
      %p176 = scmp.lt.s32.totalorder %s14, 3
      %p177 = pnand %p175, %p176
      %p178 = pneg %p177
      // Predicated region
      $region29: #{tpu_custom_call.1} parent=5 // pred_check
        _
      $region30: #{tpu_custom_call.1} parent=5 // pred_check_branch
        %180 = sbr.rel (%p177) target = $region32
      $region31: #{tpu_custom_call.1} parent=5 // pred_region
        %s181 = ssub.s32 %s14, 1
        // Predicated region
        $region33: #{tpu_custom_call.1} parent=31 // pred_check
          %p182 = pneg %p35
        $region34: #{tpu_custom_call.1} parent=31 // pred_check_branch
          %184 = sbr.rel (%p182) target = $region36
        $region35: #{tpu_custom_call.1} parent=31 // pred_region
          %186 = dma.done [#allocation3], 2048
        $region36: #{tpu_custom_call.1} parent=31 // pred_fallthru
          _
        // Predicated region
        $region37: #{tpu_custom_call.1} parent=31 // pred_check
          %p187 = pneg %p56
        $region38: #{tpu_custom_call.1} parent=31 // pred_check_branch
          %189 = sbr.rel (%p187) target = $region40
        $region39: #{tpu_custom_call.1} parent=31 // pred_region
          %191 = dma.done [#allocation6], 16
        $region40: #{tpu_custom_call.1} parent=31 // pred_fallthru
          _
        %s192 = sand.u32 %s19, 1
        %s193 = scalar_lea.sflag [#allocation3], %s192
        %s194 = sand.u32 %s69, 1
        %s195 = smul.addr %s194, 32
        %s196 = scalar_lea.vmem [#allocation7], %s195
        // Predicated region
        $region41: #{tpu_custom_call.1} parent=31 // pred_check
          %p197 = pneg %p82
        $region42: #{tpu_custom_call.1} parent=31 // pred_check_branch
          %199 = sbr.rel (%p197) target = $region44
        $region43: #{tpu_custom_call.1} parent=31 // pred_region
          %201 = dma.done %s193, 512
        $region44: #{tpu_custom_call.1} parent=31 // pred_fallthru
          _
        %p202 = pneg %p35
        %p203 = pneg %p32
        %p204 = pneg %p56
        %p205 = pneg %p53
        %s206 = sand.u32 %s19, 1
        %s207 = scalar_lea.sflag [#allocation3], %s206
        %s208 = sand.u32 %s69, 1
        %s209 = smul.addr %s208, 32
        %s210 = scalar_lea.vmem [#allocation7], %s209
        %p211 = pneg %p82
        %p212 = pneg %p79
        %p213 = pneg %p108
        %p214 = pneg %p105
        %s215 = sand.u32 %s95, 1
        %s216 = scalar_lea.sflag [#allocation4], %s215
        %s217 = sand.u32 %s95, 1
        %s218 = smul.addr %s217, 32
        %s219 = scalar_lea.vmem [#allocation8], %s218
        %s220 = smul.u32 4, %s19
        %s221 = smul.u32 4, %s19
        %v222 = vld [vmem:[%s196] sm:$0xff]
        %v223 = vld [vmem:[%s196 + $0x8] sm:$0xff]
        %v224 = vld [vmem:[%s196 + $0x10] sm:$0xff]
        %v225 = vld [vmem:[%s196 + $0x18] sm:$0xff]
        %v226 = vld [vmem:[#allocation2] sm:$0xff]
        %v227 = vld [vmem:[#allocation2 + $0x8] sm:$0xff]
        %v228 = vld [vmem:[#allocation2 + $0x10] sm:$0xff]
        %v229 = vld [vmem:[#allocation2 + $0x18] sm:$0xff]
        %v230 = vld [vmem:[#allocation2 + $0x20] sm:$0xff]
        %v231 = vld [vmem:[#allocation2 + $0x28] sm:$0xff]
        %v232 = vld [vmem:[#allocation2 + $0x30] sm:$0xff]
        %v233 = vld [vmem:[#allocation2 + $0x38] sm:$0xff]
        %v234 = vld [vmem:[#allocation2 + $0x40] sm:$0xff]
        %v235 = vld [vmem:[#allocation2 + $0x48] sm:$0xff]
        %v236 = vld [vmem:[#allocation2 + $0x50] sm:$0xff]
        %v237 = vld [vmem:[#allocation2 + $0x58] sm:$0xff]
        %v238 = vld [vmem:[#allocation2 + $0x60] sm:$0xff]
        %v239 = vld [vmem:[#allocation2 + $0x68] sm:$0xff]
        %v240 = vld [vmem:[#allocation2 + $0x70] sm:$0xff]
        %v241 = vld [vmem:[#allocation2 + $0x78] sm:$0xff]
        %v242 = vld [vmem:[#allocation5] sm:$0x1]
        %v244 = vperm.slane %v242, 0
        %246 = vmatpush.msra.mxu0 %v241
        %247 = vmatpush.msra.mxu0 %v240
        %248 = vmatpush.msra.mxu0 %v239
        %249 = vmatpush.msra.mxu0 %v238
        %250 = vmatpush.msra.mxu0 %v237
        %251 = vmatpush.msra.mxu0 %v236
        %252 = vmatpush.msra.mxu0 %v235
        %253 = vmatpush.msra.mxu0 %v234
        %254 = vmatpush.msra.mxu0 %v233
        %255 = vmatpush.msra.mxu0 %v232
        %256 = vmatpush.msra.mxu0 %v231
        %257 = vmatpush.msra.mxu0 %v230
        %258 = vmatpush.msra.mxu0 %v229
        %259 = vmatpush.msra.mxu0 %v228
        %260 = vmatpush.msra.mxu0 %v227
        %261 = vmatpush.msra.mxu0 %v226
        %262 = vmatmul.f32.gmra.mxu0 %v222
        %v263 = vpop.f32.mrf.mxu0
        %v264 = vadd.f32 %v244, %v263
        %265 = vmatmul.f32.gmra.mxu0 %v223
        %v266 = vpop.f32.mrf.mxu0
        %v267 = vadd.f32 %v244, %v266
        %268 = vmatmul.f32.gmra.mxu0 %v224
        %v269 = vpop.f32.mrf.mxu0
        %v270 = vadd.f32 %v244, %v269
        %271 = vmatmul.f32.gmra.mxu0 %v225
        %v272 = vpop.f32.mrf.mxu0
        %v273 = vadd.f32 %v244, %v272
        %274 = vdwg.mxu0
        %275 = vst [vmem:[%s219] sm:$0xff] %v264
        %276 = vst [vmem:[%s219 + $0x8] sm:$0xff] %v267
        %277 = vst [vmem:[%s219 + $0x10] sm:$0xff] %v270
        %278 = vst [vmem:[%s219 + $0x18] sm:$0xff] %v273
        %s279 = sand.u32 %s95, 1
        %s280 = scalar_lea.sflag [#allocation4], %s279
        %s281 = sand.u32 %s95, 1
        %s282 = smul.addr %s281, 32
        %s283 = scalar_lea.vmem [#allocation8], %s282
        // Predicated region
        $region45: #{tpu_custom_call.1} parent=31 // pred_check
          %p284 = pneg %p105
        $region46: #{tpu_custom_call.1} parent=31 // pred_check_branch
          %286 = sbr.rel (%p284) target = $region48
        $region47: #{tpu_custom_call.1} parent=31 // pred_region
          %s287 = smul.u32 4, %s19
          %289 = vsyncadd %s280, 0
          %s290 = smul.addr %s287, 8
          %s291 = scalar_lea.hbm %s3, %s290
          %s292 = sshll.u32 %s283, 4
          %s293 = int_to_ptr.vmem [resolvable:$true] %s292
          %s294 = sshll.u32 %s291, 4
          %s295 = int_to_ptr.hbm [resolvable:$true] %s294
          %300 = dma.vmem_to_hbm [thread:$0]  %s293, 512, %s295, %s280, 128, 128, 8
        $region48: #{tpu_custom_call.1} parent=31 // pred_fallthru
          _
      $region32: #{tpu_custom_call.1} parent=5 // pred_fallthru
        _
      %p301 = scmp.le.s32.totalorder 2, %s14
      // Predicated region
      $region49: #{tpu_custom_call.1} parent=5 // pred_check
        %p302 = pneg %p301
      $region50: #{tpu_custom_call.1} parent=5 // pred_check_branch
        %304 = sbr.rel (%p302) target = $region52
      $region51: #{tpu_custom_call.1} parent=5 // pred_region
        %s305 = ssub.s32 %s14, 2
        // Predicated region
        $region53: #{tpu_custom_call.1} parent=51 // pred_check
          %p306 = pneg %p111
        $region54: #{tpu_custom_call.1} parent=51 // pred_check_branch
          %308 = sbr.rel (%p306) target = $region56
        $region55: #{tpu_custom_call.1} parent=51 // pred_region
          %s309 = sand.u32 %s96, 1
          %s310 = scalar_lea.sflag [#allocation4], %s309
          %s311 = sand.u32 %s96, 1
          %s312 = smul.addr %s311, 32
          %s313 = scalar_lea.vmem [#allocation8], %s312
          %315 = dma.done %s310, 512
        $region56: #{tpu_custom_call.1} parent=51 // pred_fallthru
          _
      $region52: #{tpu_custom_call.1} parent=5 // pred_fallthru
        _
    $region6: #{tpu_custom_call.1} parent=1 // loop_footer
      %s18 = sadd.s32 1, %s14
    $region7: #{tpu_custom_call.1} parent=1 // loop_footer_branch
      %13 = sbr.rel target = $region3
    $region8: #{tpu_custom_call.1} parent=1 // loop_exit
      _
    %316 = vsyncpa [#allocation3], 1
    %s317 = scalar_lea.sflag [#allocation3], 1
    %318 = vsyncpa %s317, 1
    %319 = vsyncpa [#allocation6], 1
    %320 = vsyncpa [#allocation4], 1
    %s321 = scalar_lea.sflag [#allocation4], 1
    %322 = vsyncpa %s321, 1

</llo_original>
